<compile_context>
chip_gen: v7x
topology: tpu7x:2x2x1
jax: 0.10.0
libtpu: 0.0.40
codegen_flags: <defaults>
</compile_context>

<pallas_src>
import math

import jax
import jax.numpy as jnp
from jax.experimental import pallas as pl
from jax.experimental.pallas import tpu as pltpu


# ----------------------------------------------------------------------------- helpers


def _round_up(x: int, m: int) -> int:
    return (x + m - 1) // m * m


def gaussian_taps_1d(kernel_size: int, sigma: float):
    """Normalized 1-D Gaussian taps as plain Python floats (baked into the kernel).

    outer(taps, taps) == the module's normalized 2-D kernel (separable)."""
    mean = (kernel_size - 1) / 2.0
    g = [math.exp(-(((i - mean) / sigma) ** 2) / 2.0) for i in range(kernel_size)]
    s = sum(g)
    return [v / s for v in g]


def make_gaussian_weight(channels: int, kernel_size: int, sigma: float) -> jnp.ndarray:
    """Reproduce GaussianSmoothing.__init__ buffer 'weight' (C, 1, K, K) — reference only."""
    ks = [kernel_size, kernel_size]
    sg = [sigma, sigma]
    grids = jnp.meshgrid(*[jnp.arange(s, dtype=jnp.float32) for s in ks], indexing="ij")
    kernel = jnp.ones((), jnp.float32)
    for size, std, mgrid in zip(ks, sg, grids):
        mean = (size - 1) / 2.0
        kernel = kernel * (1.0 / (std * math.sqrt(2.0 * math.pi))
                           * jnp.exp(-(((mgrid - mean) / std) ** 2) / 2.0))
    kernel = kernel / jnp.sum(kernel)
    kernel = kernel.reshape(1, 1, kernel_size, kernel_size)
    return jnp.tile(kernel, (channels, 1, 1, 1))


# ----------------------------------------------------------------------------- sizing


def _block_bytes(bnc: int, h: int, w: int, ho: int, wo: int, itemsize: int) -> int:
    """Padded, double-buffered VMEM footprint for one grid step (in + out blocks)."""
    sub = 8 * max(1, 4 // max(itemsize, 1))          # sublane granularity (f32:8, bf16:16, i8:32)
    in_b = h * _round_up(w, sub) * bnc * itemsize
    out_b = ho * _round_up(wo, sub) * bnc * itemsize
    return 2 * (in_b + out_b)                         # 2x = BlockSpec double-buffering


def _vmem_capacity_bytes() -> int:
    try:
        return int(pltpu.get_tpu_info().vmem_capacity_bytes)
    except Exception:
        return 64 * 1024 * 1024                       # conservative (v7x per-TC VMEM)


def _pick_bnc(nc128: int, h: int, w: int, ho: int, wo: int, itemsize: int, budget: int) -> int:
    """Largest multiple-of-128 divisor of the padded N*C extent whose padded,
    double-buffered block footprint fits the budget; prefers >=2 grid steps so the
    NC axis can be sharded across TensorCores (v7x has 2 TCs per chip)."""
    cands = [d for d in range(128, nc128 + 1, 128)
             if nc128 % d == 0 and _block_bytes(d, h, w, ho, wo, itemsize) <= budget]
    if not cands:
        # TODO(synk): very large single images would additionally need H-strip tiling
        # with a 6-row halo (pl.Element index map or manual make_async_copy).
        return 128
    multi_step = [d for d in cands if nc128 // d >= 2]
    return max(multi_step) if multi_step else max(cands)


# ----------------------------------------------------------------------------- kernel


def _make_smooth_kernel(taps, kh: int, kw: int, ho: int, wo: int, bnc: int,
                        lane_chunk: int = 128):
    """Fused separable 7x7 Gaussian; N*C on the lane axis, processed in 128-lane chunks."""
    n_chunks = bnc // lane_chunk

    def kernel(x_ref, o_ref):
        # x_ref: (H, W, bnc)   input block,  lanes = folded (n, c)
        # o_ref: (Ho, Wo, bnc) output block, lanes = folded (n, c)
        for c in range(n_chunks):                     # static offsets -> zero-cost views
            lo = c * lane_chunk
            hi = lo + lane_chunk

            x = x_ref[:, :, lo:hi].astype(jnp.float32)

            # Vertical pass: taps along the leading (row) axis -> cheap vreg selection.
            v = taps[0] * x[0:ho]
            for ki in range(1, kh):
                v = v + taps[ki] * x[ki:ki + ho]

            # Horizontal pass: taps along the sublane (column) axis.
            out = taps[0] * v[:, 0:wo]
            for kj in range(1, kw):
                out = out + taps[kj] * v[:, kj:kj + wo]

            o_ref[:, :, lo:hi] = out.astype(o_ref.dtype)

    return kernel


# ----------------------------------------------------------------------------- wrapper


def gaussian_smoothing(x: jnp.ndarray, kernel_size: int = 7, sigma: float = 1.6) -> jnp.ndarray:
    """x: (N, C, H, W) -> (N, C, H-K+1, W-K+1), depthwise Gaussian smoothing."""
    N, C, H, W = x.shape
    kh = kw = kernel_size
    if H < kh or W < kw:
        raise ValueError(
            f"Spatial dims ({H},{W}) must be >= kernel_size={kernel_size} for a valid conv.")
    ho, wo = H - kh + 1, W - kw + 1
    nc = N * C
    nc128 = _round_up(nc, 128)
    itemsize = jnp.dtype(x.dtype).itemsize

    taps = tuple(gaussian_taps_1d(kernel_size, sigma))

    # Channels-last plumbing: fold (N, C) onto the lane axis, pad to a multiple of 128.
    xr = jnp.transpose(x, (2, 3, 0, 1)).reshape(H, W, nc)
    if nc128 != nc:
        xr = jnp.pad(xr, ((0, 0), (0, 0), (0, nc128 - nc)))

    cap = _vmem_capacity_bytes()
    budget = min(96 * 1024 * 1024, int(cap * 0.65))   # ~41 MiB on v7x, ~83 MiB on v5e/v6e
    bnc = _pick_bnc(nc128, H, W, ho, wo, itemsize, budget)
    grid = (nc128 // bnc,)

    footprint = _block_bytes(bnc, H, W, ho, wo, itemsize)
    vmem_limit = int(min(int(cap * 0.9),
                         max(32 * 1024 * 1024, footprint + 8 * 1024 * 1024)))

    cost = pl.CostEstimate(
        flops=int(nc * ho * (W * (2 * kh - 1) + wo * (2 * kw - 1))),
        transcendentals=0,
        bytes_accessed=int(itemsize * nc128 * (H * W + ho * wo)),
    )

    out = pl.pallas_call(
        _make_smooth_kernel(taps, kh, kw, ho, wo, bnc),
        out_shape=jax.ShapeDtypeStruct((ho, wo, nc128), x.dtype),
        grid_spec=pltpu.PrefetchScalarGridSpec(
            num_scalar_prefetch=0,
            grid=grid,
            in_specs=[pl.BlockSpec((H, W, bnc), lambda i: (0, 0, i))],
            out_specs=pl.BlockSpec((ho, wo, bnc), lambda i: (0, 0, i)),
        ),
        compiler_params=pltpu.CompilerParams(
            dimension_semantics=("parallel",),
            vmem_limit_bytes=vmem_limit,
        ),
        cost_estimate=cost,
    )(xr)

    out = out[:, :, :nc].reshape(ho, wo, N, C)
    return jnp.transpose(out, (2, 3, 0, 1))


# ----------------------------------------------------------------------------- reference


def _reference(x, weight, channels):
    # Plain-JAX reference: grouped (depthwise) valid conv, NCHW / OIHW.
    return jax.lax.conv_general_dilated(
        x, weight,
        window_strides=(1, 1),
        padding="VALID",
        dimension_numbers=("NCHW", "OIHW", "NCHW"),
        feature_group_count=channels,
    )


if __name__ == "__main__":
    channels, kernel_size, sigma = 3, 7, 1.6

    key = jax.random.PRNGKey(0)
    x = jax.random.normal(key, (2, channels, 16, 16), dtype=jnp.float32)

    out = gaussian_smoothing(x, kernel_size=kernel_size, sigma=sigma)
    out = jax.block_until_ready(out)

    weight = make_gaussian_weight(channels, kernel_size, sigma)  # (3, 1, 7, 7)
    ref = _reference(x, weight, channels)

    assert out.shape == (2, channels, 10, 10), out.shape
    assert jnp.allclose(out, ref, atol=1e-5, rtol=1e-5), float(jnp.max(jnp.abs(out - ref)))

    print("KERNEL_OK")
</pallas_src>

<mosaic_0001>
module attributes {stable_mosaic.version = 11 : i64} {
  func.func @kernel(%arg0: i32, %arg1: memref<16x16x128xf32, #tpu.memory_space<vmem>>, %arg2: memref<10x10x128xf32, #tpu.memory_space<vmem>>) attributes {dimension_semantics = [#tpu.dimension_semantics<parallel>], iteration_bounds = array<i64: 1>, scalar_prefetch = 0 : i64, scratch_operands = 0 : i64, tpu.core_type = #tpu.core_type<tc>, window_params = [{transform_indices = @transform_0, window_bounds = array<i64: 16, 16, 128>}, {transform_indices = @transform_1, window_bounds = array<i64: 10, 10, 128>}]} {
    %c0 = arith.constant 0 : index
    %c0_0 = arith.constant 0 : index
    %c0_1 = arith.constant 0 : index
    %0 = vector.load %arg1[%c0, %c0_0, %c0_1] : memref<16x16x128xf32, #tpu.memory_space<vmem>>, vector<16x16x128xf32>
    %1 = vector.extract_strided_slice %0 {offsets = [0, 0, 0], sizes = [10, 16, 128], strides = [1, 1, 1]} : vector<16x16x128xf32> to vector<10x16x128xf32>
    %cst = arith.constant 0.0441465452 : f32
    %2 = vector.broadcast %cst : f32 to vector<10x16x128xf32>
    %3 = arith.mulf %2, %1 : vector<10x16x128xf32>
    %4 = vector.extract_strided_slice %0 {offsets = [1, 0, 0], sizes = [10, 16, 128], strides = [1, 1, 1]} : vector<16x16x128xf32> to vector<10x16x128xf32>
    %cst_2 = arith.constant 0.11722289 : f32
    %5 = vector.broadcast %cst_2 : f32 to vector<10x16x128xf32>
    %6 = arith.mulf %5, %4 : vector<10x16x128xf32>
    %7 = arith.addf %3, %6 : vector<10x16x128xf32>
    %8 = vector.extract_strided_slice %0 {offsets = [2, 0, 0], sizes = [10, 16, 128], strides = [1, 1, 1]} : vector<16x16x128xf32> to vector<10x16x128xf32>
    %cst_3 = arith.constant 0.210611388 : f32
    %9 = vector.broadcast %cst_3 : f32 to vector<10x16x128xf32>
    %10 = arith.mulf %9, %8 : vector<10x16x128xf32>
    %11 = arith.addf %7, %10 : vector<10x16x128xf32>
    %12 = vector.extract_strided_slice %0 {offsets = [3, 0, 0], sizes = [10, 16, 128], strides = [1, 1, 1]} : vector<16x16x128xf32> to vector<10x16x128xf32>
    %cst_4 = arith.constant 0.256038338 : f32
    %13 = vector.broadcast %cst_4 : f32 to vector<10x16x128xf32>
    %14 = arith.mulf %13, %12 : vector<10x16x128xf32>
    %15 = arith.addf %11, %14 : vector<10x16x128xf32>
    %16 = vector.extract_strided_slice %0 {offsets = [4, 0, 0], sizes = [10, 16, 128], strides = [1, 1, 1]} : vector<16x16x128xf32> to vector<10x16x128xf32>
    %cst_5 = arith.constant 0.210611388 : f32
    %17 = vector.broadcast %cst_5 : f32 to vector<10x16x128xf32>
    %18 = arith.mulf %17, %16 : vector<10x16x128xf32>
    %19 = arith.addf %15, %18 : vector<10x16x128xf32>
    %20 = vector.extract_strided_slice %0 {offsets = [5, 0, 0], sizes = [10, 16, 128], strides = [1, 1, 1]} : vector<16x16x128xf32> to vector<10x16x128xf32>
    %cst_6 = arith.constant 0.11722289 : f32
    %21 = vector.broadcast %cst_6 : f32 to vector<10x16x128xf32>
    %22 = arith.mulf %21, %20 : vector<10x16x128xf32>
    %23 = arith.addf %19, %22 : vector<10x16x128xf32>
    %24 = vector.extract_strided_slice %0 {offsets = [6, 0, 0], sizes = [10, 16, 128], strides = [1, 1, 1]} : vector<16x16x128xf32> to vector<10x16x128xf32>
    %cst_7 = arith.constant 0.0441465452 : f32
    %25 = vector.broadcast %cst_7 : f32 to vector<10x16x128xf32>
    %26 = arith.mulf %25, %24 : vector<10x16x128xf32>
    %27 = arith.addf %23, %26 : vector<10x16x128xf32>
    %28 = vector.extract_strided_slice %27 {offsets = [0, 0, 0], sizes = [10, 10, 128], strides = [1, 1, 1]} : vector<10x16x128xf32> to vector<10x10x128xf32>
    %cst_8 = arith.constant 0.0441465452 : f32
    %29 = vector.broadcast %cst_8 : f32 to vector<10x10x128xf32>
    %30 = arith.mulf %29, %28 : vector<10x10x128xf32>
    %31 = vector.extract_strided_slice %27 {offsets = [0, 1, 0], sizes = [10, 10, 128], strides = [1, 1, 1]} : vector<10x16x128xf32> to vector<10x10x128xf32>
    %cst_9 = arith.constant 0.11722289 : f32
    %32 = vector.broadcast %cst_9 : f32 to vector<10x10x128xf32>
    %33 = arith.mulf %32, %31 : vector<10x10x128xf32>
    %34 = arith.addf %30, %33 : vector<10x10x128xf32>
    %35 = vector.extract_strided_slice %27 {offsets = [0, 2, 0], sizes = [10, 10, 128], strides = [1, 1, 1]} : vector<10x16x128xf32> to vector<10x10x128xf32>
    %cst_10 = arith.constant 0.210611388 : f32
    %36 = vector.broadcast %cst_10 : f32 to vector<10x10x128xf32>
    %37 = arith.mulf %36, %35 : vector<10x10x128xf32>
    %38 = arith.addf %34, %37 : vector<10x10x128xf32>
    %39 = vector.extract_strided_slice %27 {offsets = [0, 3, 0], sizes = [10, 10, 128], strides = [1, 1, 1]} : vector<10x16x128xf32> to vector<10x10x128xf32>
    %cst_11 = arith.constant 0.256038338 : f32
    %40 = vector.broadcast %cst_11 : f32 to vector<10x10x128xf32>
    %41 = arith.mulf %40, %39 : vector<10x10x128xf32>
    %42 = arith.addf %38, %41 : vector<10x10x128xf32>
    %43 = vector.extract_strided_slice %27 {offsets = [0, 4, 0], sizes = [10, 10, 128], strides = [1, 1, 1]} : vector<10x16x128xf32> to vector<10x10x128xf32>
    %cst_12 = arith.constant 0.210611388 : f32
    %44 = vector.broadcast %cst_12 : f32 to vector<10x10x128xf32>
    %45 = arith.mulf %44, %43 : vector<10x10x128xf32>
    %46 = arith.addf %42, %45 : vector<10x10x128xf32>
    %47 = vector.extract_strided_slice %27 {offsets = [0, 5, 0], sizes = [10, 10, 128], strides = [1, 1, 1]} : vector<10x16x128xf32> to vector<10x10x128xf32>
    %cst_13 = arith.constant 0.11722289 : f32
    %48 = vector.broadcast %cst_13 : f32 to vector<10x10x128xf32>
    %49 = arith.mulf %48, %47 : vector<10x10x128xf32>
    %50 = arith.addf %46, %49 : vector<10x10x128xf32>
    %51 = vector.extract_strided_slice %27 {offsets = [0, 6, 0], sizes = [10, 10, 128], strides = [1, 1, 1]} : vector<10x16x128xf32> to vector<10x10x128xf32>
    %cst_14 = arith.constant 0.0441465452 : f32
    %52 = vector.broadcast %cst_14 : f32 to vector<10x10x128xf32>
    %53 = arith.mulf %52, %51 : vector<10x10x128xf32>
    %54 = arith.addf %50, %53 : vector<10x10x128xf32>
    %c0_15 = arith.constant 0 : index
    %c0_16 = arith.constant 0 : index
    %c0_17 = arith.constant 0 : index
    %55 = vector.load %arg2[%c0_15, %c0_16, %c0_17] : memref<10x10x128xf32, #tpu.memory_space<vmem>>, vector<10x10x128xf32>
    tpu.vector_store %arg2[%c0_15, %c0_16, %c0_17], %54 {strides = array<i32>} : memref<10x10x128xf32, #tpu.memory_space<vmem>>, vector<10x10x128xf32>,
    return
  }
  func.func @transform_0(%arg0: i32) -> (i32, i32, i32) {
    %c0_i32 = arith.constant 0 : i32
    %c0_i32_0 = arith.constant 0 : i32
    %c0_i32_1 = arith.constant 0 : i32
    return %c0_i32, %c0_i32_0, %arg0 : i32, i32, i32
  }
  func.func @transform_1(%arg0: i32) -> (i32, i32, i32) {
    %c0_i32 = arith.constant 0 : i32
    %c0_i32_0 = arith.constant 0 : i32
    %c0_i32_1 = arith.constant 0 : i32
    return %c0_i32, %c0_i32_0, %arg0 : i32, i32, i32
  }
}

</mosaic_0001>

<llo_original>
// kernel: tpu_custom_call.1
$region0: #{tpu_custom_call.1}
  #allocation0 [shape = 'u32[]', space=smem, size = 0x4, offset = 0x4, fixed_abs, tag = 'smem constant byte address 0x4 - core index']
  #allocation1 [shape = 'u32[144,128]{1,0:T(1,128)}', space=vmem, size = 0x12000, scoped, tag = 'internal scratch']
  %s0 = inlined_call_operand.hbm [shape: f32[16,16,128], index: 0, kind: input, shape index: {}]
  %s1 = inlined_call_operand.hbm [shape: f32[10,10,128], index: 1, kind: output, shape index: {}]
  %s2 = sld [smem:[#allocation0]]
  $region18: #{tpu_custom_call.1} parent=0
    _
  %s4 = ssub.s32 1, %s2
  %s5 = scalar_select 0, %s4, %s2
  $region1: #{tpu_custom_call.1} parent=0
    #allocation2 [shape = 'u8[131072]{0}', space=vmem, size = 0x20000, scoped, tag = 'input window, operand 0, single buffered']
    #allocation3 [shape = 's32[1]{0}', space=sflag, size = 0x4, scoped, tag = 'scoped memory for tpu_custom_call.1']
    #allocation4 [shape = 's32[1]{0}', space=sflag, size = 0x4, scoped, tag = 'scoped memory for tpu_custom_call.1']
    #allocation5 [shape = 'u8[81920]{0}', space=vmem, size = 0x14000, scoped, tag = 'output window, operand 0, single buffered']
    %6 = vsyncpa [#allocation3], 0
    %7 = vsyncpa [#allocation4], 0
    // Predicated region
    $region2: #{tpu_custom_call.1} parent=1 // pred_check
      _
    $region3: #{tpu_custom_call.1} parent=1 // pred_check_branch
      %9 = sbr.rel (0) target = $region5
    $region4: #{tpu_custom_call.1} parent=1 // pred_region
      %s11 = ssub.s32 4096, 4096
      %12 = vsyncadd [#allocation3], %s11
      %s13 = sshll.u32 [#allocation2], 4
      %s14 = int_to_ptr.vmem [resolvable:$true] %s13
      %19 = dma.hbm_to_vmem [thread:$0]  %s0, 4096, %s14, [#allocation3], 128, 128, 8
    $region5: #{tpu_custom_call.1} parent=1 // pred_fallthru
      _
    // Predicated region
    $region6: #{tpu_custom_call.1} parent=1 // pred_check
      _
    $region7: #{tpu_custom_call.1} parent=1 // pred_check_branch
      %21 = sbr.rel (0) target = $region9
    $region8: #{tpu_custom_call.1} parent=1 // pred_region
      %22 = dma.done [#allocation3], 4096
    $region9: #{tpu_custom_call.1} parent=1 // pred_fallthru
      _
    %v23 = vld [vmem:[#allocation2] sm:$0xff]
    %v24 = vld [vmem:[#allocation2 + $0x8] sm:$0xff]
    %v25 = vld [vmem:[#allocation2 + $0x10] sm:$0xff]
    %v26 = vld [vmem:[#allocation2 + $0x18] sm:$0xff]
    %v27 = vld [vmem:[#allocation2 + $0x20] sm:$0xff]
    %v28 = vld [vmem:[#allocation2 + $0x28] sm:$0xff]
    %v29 = vld [vmem:[#allocation2 + $0x30] sm:$0xff]
    %v30 = vld [vmem:[#allocation2 + $0x38] sm:$0xff]
    %v31 = vld [vmem:[#allocation2 + $0x40] sm:$0xff]
    %v32 = vld [vmem:[#allocation2 + $0x48] sm:$0xff]
    %v33 = vld [vmem:[#allocation2 + $0x50] sm:$0xff]
    %v34 = vld [vmem:[#allocation2 + $0x58] sm:$0xff]
    %v35 = vld [vmem:[#allocation2 + $0x60] sm:$0xff]
    %v36 = vld [vmem:[#allocation2 + $0x68] sm:$0xff]
    %v37 = vld [vmem:[#allocation2 + $0x70] sm:$0xff]
    %v38 = vld [vmem:[#allocation2 + $0x78] sm:$0xff]
    %v39 = vld [vmem:[#allocation2 + $0x80] sm:$0xff]
    %v40 = vld [vmem:[#allocation2 + $0x88] sm:$0xff]
    %v41 = vld [vmem:[#allocation2 + $0x90] sm:$0xff]
    %v42 = vld [vmem:[#allocation2 + $0x98] sm:$0xff]
    %v43 = vld [vmem:[#allocation2 + $0xa0] sm:$0xff]
    %v44 = vld [vmem:[#allocation2 + $0xa8] sm:$0xff]
    %v45 = vld [vmem:[#allocation2 + $0xb0] sm:$0xff]
    %v46 = vld [vmem:[#allocation2 + $0xb8] sm:$0xff]
    %v47 = vld [vmem:[#allocation2 + $0xc0] sm:$0xff]
    %v48 = vld [vmem:[#allocation2 + $0xc8] sm:$0xff]
    %v49 = vld [vmem:[#allocation2 + $0xd0] sm:$0xff]
    %v50 = vld [vmem:[#allocation2 + $0xd8] sm:$0xff]
    %v51 = vld [vmem:[#allocation2 + $0xe0] sm:$0xff]
    %v52 = vld [vmem:[#allocation2 + $0xe8] sm:$0xff]
    %v53 = vld [vmem:[#allocation2 + $0xf0] sm:$0xff]
    %v54 = vld [vmem:[#allocation2 + $0xf8] sm:$0xff]
    %v55 = vmul.f32 %v23, 0.044146545
    %v56 = vmul.f32 %v24, 0.044146545
    %v57 = vmul.f32 %v25, 0.044146545
    %v58 = vmul.f32 %v26, 0.044146545
    %v59 = vmul.f32 %v27, 0.044146545
    %v60 = vmul.f32 %v28, 0.044146545
    %v61 = vmul.f32 %v29, 0.044146545
    %v62 = vmul.f32 %v30, 0.044146545
    %v63 = vmul.f32 %v31, 0.044146545
    %v64 = vmul.f32 %v32, 0.044146545
    %v65 = vmul.f32 %v33, 0.044146545
    %v66 = vmul.f32 %v34, 0.044146545
    %v67 = vmul.f32 %v35, 0.044146545
    %v68 = vmul.f32 %v36, 0.044146545
    %v69 = vmul.f32 %v37, 0.044146545
    %v70 = vmul.f32 %v38, 0.044146545
    %v71 = vmul.f32 %v39, 0.044146545
    %v72 = vmul.f32 %v40, 0.044146545
    %v73 = vmul.f32 %v41, 0.044146545
    %v74 = vmul.f32 %v42, 0.044146545
    %v75 = vmul.f32 %v25, 0.11722289
    %v76 = vmul.f32 %v26, 0.11722289
    %v77 = vmul.f32 %v27, 0.11722289
    %v78 = vmul.f32 %v28, 0.11722289
    %v79 = vmul.f32 %v29, 0.11722289
    %v80 = vmul.f32 %v30, 0.11722289
    %v81 = vmul.f32 %v31, 0.11722289
    %v82 = vmul.f32 %v32, 0.11722289
    %v83 = vmul.f32 %v33, 0.11722289
    %v84 = vmul.f32 %v34, 0.11722289
    %v85 = vmul.f32 %v35, 0.11722289
    %v86 = vmul.f32 %v36, 0.11722289
    %v87 = vmul.f32 %v37, 0.11722289
    %v88 = vmul.f32 %v38, 0.11722289
    %v89 = vmul.f32 %v39, 0.11722289
    %v90 = vmul.f32 %v40, 0.11722289
    %v91 = vmul.f32 %v41, 0.11722289
    %v92 = vmul.f32 %v42, 0.11722289
    %v93 = vmul.f32 %v43, 0.11722289
    %v94 = vmul.f32 %v44, 0.11722289
    %v95 = vadd.f32 %v55, %v75
    %v96 = vadd.f32 %v56, %v76
    %v97 = vadd.f32 %v57, %v77
    %v98 = vadd.f32 %v58, %v78
    %v99 = vadd.f32 %v59, %v79
    %v100 = vadd.f32 %v60, %v80
    %v101 = vadd.f32 %v61, %v81
    %v102 = vadd.f32 %v62, %v82
    %v103 = vadd.f32 %v63, %v83
    %v104 = vadd.f32 %v64, %v84
    %v105 = vadd.f32 %v65, %v85
    %v106 = vadd.f32 %v66, %v86
    %v107 = vadd.f32 %v67, %v87
    %v108 = vadd.f32 %v68, %v88
    %v109 = vadd.f32 %v69, %v89
    %v110 = vadd.f32 %v70, %v90
    %v111 = vadd.f32 %v71, %v91
    %v112 = vadd.f32 %v72, %v92
    %v113 = vadd.f32 %v73, %v93
    %v114 = vadd.f32 %v74, %v94
    %v115 = vmul.f32 %v27, 0.21061139
    %v116 = vmul.f32 %v28, 0.21061139
    %v117 = vmul.f32 %v29, 0.21061139
    %v118 = vmul.f32 %v30, 0.21061139
    %v119 = vmul.f32 %v31, 0.21061139
    %v120 = vmul.f32 %v32, 0.21061139
    %v121 = vmul.f32 %v33, 0.21061139
    %v122 = vmul.f32 %v34, 0.21061139
    %v123 = vmul.f32 %v35, 0.21061139
    %v124 = vmul.f32 %v36, 0.21061139
    %v125 = vmul.f32 %v37, 0.21061139
    %v126 = vmul.f32 %v38, 0.21061139
    %v127 = vmul.f32 %v39, 0.21061139
    %v128 = vmul.f32 %v40, 0.21061139
    %v129 = vmul.f32 %v41, 0.21061139
    %v130 = vmul.f32 %v42, 0.21061139
    %v131 = vmul.f32 %v43, 0.21061139
    %v132 = vmul.f32 %v44, 0.21061139
    %v133 = vmul.f32 %v45, 0.21061139
    %v134 = vmul.f32 %v46, 0.21061139
    %v135 = vadd.f32 %v95, %v115
    %v136 = vadd.f32 %v96, %v116
    %v137 = vadd.f32 %v97, %v117
    %v138 = vadd.f32 %v98, %v118
    %v139 = vadd.f32 %v99, %v119
    %v140 = vadd.f32 %v100, %v120
    %v141 = vadd.f32 %v101, %v121
    %v142 = vadd.f32 %v102, %v122
    %v143 = vadd.f32 %v103, %v123
    %v144 = vadd.f32 %v104, %v124
    %v145 = vadd.f32 %v105, %v125
    %v146 = vadd.f32 %v106, %v126
    %v147 = vadd.f32 %v107, %v127
    %v148 = vadd.f32 %v108, %v128
    %v149 = vadd.f32 %v109, %v129
    %v150 = vadd.f32 %v110, %v130
    %v151 = vadd.f32 %v111, %v131
    %v152 = vadd.f32 %v112, %v132
    %v153 = vadd.f32 %v113, %v133
    %v154 = vadd.f32 %v114, %v134
    %v155 = vmul.f32 %v29, 0.25603834
    %v156 = vmul.f32 %v30, 0.25603834
    %v157 = vmul.f32 %v31, 0.25603834
    %v158 = vmul.f32 %v32, 0.25603834
    %v159 = vmul.f32 %v33, 0.25603834
    %v160 = vmul.f32 %v34, 0.25603834
    %v161 = vmul.f32 %v35, 0.25603834
    %v162 = vmul.f32 %v36, 0.25603834
    %v163 = vmul.f32 %v37, 0.25603834
    %v164 = vmul.f32 %v38, 0.25603834
    %v165 = vmul.f32 %v39, 0.25603834
    %v166 = vmul.f32 %v40, 0.25603834
    %v167 = vmul.f32 %v41, 0.25603834
    %v168 = vmul.f32 %v42, 0.25603834
    %v169 = vmul.f32 %v43, 0.25603834
    %v170 = vmul.f32 %v44, 0.25603834
    %v171 = vmul.f32 %v45, 0.25603834
    %v172 = vmul.f32 %v46, 0.25603834
    %v173 = vmul.f32 %v47, 0.25603834
    %v174 = vmul.f32 %v48, 0.25603834
    %v175 = vadd.f32 %v135, %v155
    %v176 = vadd.f32 %v136, %v156
    %v177 = vadd.f32 %v137, %v157
    %v178 = vadd.f32 %v138, %v158
    %v179 = vadd.f32 %v139, %v159
    %v180 = vadd.f32 %v140, %v160
    %v181 = vadd.f32 %v141, %v161
    %v182 = vadd.f32 %v142, %v162
    %v183 = vadd.f32 %v143, %v163
    %v184 = vadd.f32 %v144, %v164
    %v185 = vadd.f32 %v145, %v165
    %v186 = vadd.f32 %v146, %v166
    %v187 = vadd.f32 %v147, %v167
    %v188 = vadd.f32 %v148, %v168
    %v189 = vadd.f32 %v149, %v169
    %v190 = vadd.f32 %v150, %v170
    %v191 = vadd.f32 %v151, %v171
    %v192 = vadd.f32 %v152, %v172
    %v193 = vadd.f32 %v153, %v173
    %v194 = vadd.f32 %v154, %v174
    %v195 = vmul.f32 %v47, 0.21061139
    %v196 = vmul.f32 %v48, 0.21061139
    %v197 = vmul.f32 %v49, 0.21061139
    %v198 = vmul.f32 %v50, 0.21061139
    %v199 = vadd.f32 %v175, %v119
    %v200 = vadd.f32 %v176, %v120
    %v201 = vadd.f32 %v177, %v121
    %v202 = vadd.f32 %v178, %v122
    %v203 = vadd.f32 %v179, %v123
    %v204 = vadd.f32 %v180, %v124
    %v205 = vadd.f32 %v181, %v125
    %v206 = vadd.f32 %v182, %v126
    %v207 = vadd.f32 %v183, %v127
    %v208 = vadd.f32 %v184, %v128
    %v209 = vadd.f32 %v185, %v129
    %v210 = vadd.f32 %v186, %v130
    %v211 = vadd.f32 %v187, %v131
    %v212 = vadd.f32 %v188, %v132
    %v213 = vadd.f32 %v189, %v133
    %v214 = vadd.f32 %v190, %v134
    %v215 = vadd.f32 %v191, %v195
    %v216 = vadd.f32 %v192, %v196
    %v217 = vadd.f32 %v193, %v197
    %v218 = vadd.f32 %v194, %v198
    %v219 = vmul.f32 %v45, 0.11722289
    %v220 = vmul.f32 %v46, 0.11722289
    %v221 = vmul.f32 %v47, 0.11722289
    %v222 = vmul.f32 %v48, 0.11722289
    %v223 = vmul.f32 %v49, 0.11722289
    %v224 = vmul.f32 %v50, 0.11722289
    %v225 = vmul.f32 %v51, 0.11722289
    %v226 = vmul.f32 %v52, 0.11722289
    %v227 = vadd.f32 %v199, %v83
    %v228 = vadd.f32 %v200, %v84
    %v229 = vadd.f32 %v201, %v85
    %v230 = vadd.f32 %v202, %v86
    %v231 = vadd.f32 %v203, %v87
    %v232 = vadd.f32 %v204, %v88
    %v233 = vadd.f32 %v205, %v89
    %v234 = vadd.f32 %v206, %v90
    %v235 = vadd.f32 %v207, %v91
    %v236 = vadd.f32 %v208, %v92
    %v237 = vadd.f32 %v209, %v93
    %v238 = vadd.f32 %v210, %v94
    %v239 = vadd.f32 %v211, %v219
    %v240 = vadd.f32 %v212, %v220
    %v241 = vadd.f32 %v213, %v221
    %v242 = vadd.f32 %v214, %v222
    %v243 = vadd.f32 %v215, %v223
    %v244 = vadd.f32 %v216, %v224
    %v245 = vadd.f32 %v217, %v225
    %v246 = vadd.f32 %v218, %v226
    %v247 = vmul.f32 %v43, 0.044146545
    %v248 = vmul.f32 %v44, 0.044146545
    %v249 = vmul.f32 %v45, 0.044146545
    %v250 = vmul.f32 %v46, 0.044146545
    %v251 = vmul.f32 %v47, 0.044146545
    %v252 = vmul.f32 %v48, 0.044146545
    %v253 = vmul.f32 %v49, 0.044146545
    %v254 = vmul.f32 %v50, 0.044146545
    %v255 = vmul.f32 %v51, 0.044146545
    %v256 = vmul.f32 %v52, 0.044146545
    %v257 = vmul.f32 %v53, 0.044146545
    %v258 = vmul.f32 %v54, 0.044146545
    %v259 = vadd.f32 %v227, %v67
    %v260 = vadd.f32 %v228, %v68
    %v261 = vadd.f32 %v229, %v69
    %v262 = vadd.f32 %v230, %v70
    %v263 = vadd.f32 %v231, %v71
    %v264 = vadd.f32 %v232, %v72
    %v265 = vadd.f32 %v233, %v73
    %v266 = vadd.f32 %v234, %v74
    %v267 = vadd.f32 %v235, %v247
    %v268 = vadd.f32 %v236, %v248
    %v269 = vadd.f32 %v237, %v249
    %v270 = vadd.f32 %v238, %v250
    %v271 = vadd.f32 %v239, %v251
    %v272 = vadd.f32 %v240, %v252
    %v273 = vadd.f32 %v241, %v253
    %v274 = vadd.f32 %v242, %v254
    %v275 = vadd.f32 %v243, %v255
    %v276 = vadd.f32 %v244, %v256
    %v277 = vadd.f32 %v245, %v257
    %v278 = vadd.f32 %v246, %v258
    %v279 = vmul.f32 %v259, 0.044146545
    %v280 = vmul.f32 %v260, 0.044146545
    %v281 = vmul.f32 %v261, 0.044146545
    %v282 = vmul.f32 %v262, 0.044146545
    %v283 = vmul.f32 %v263, 0.044146545
    %v284 = vmul.f32 %v264, 0.044146545
    %v285 = vmul.f32 %v265, 0.044146545
    %v286 = vmul.f32 %v266, 0.044146545
    %v287 = vmul.f32 %v267, 0.044146545
    %v288 = vmul.f32 %v268, 0.044146545
    %v289 = vmul.f32 %v269, 0.044146545
    %v290 = vmul.f32 %v270, 0.044146545
    %v291 = vmul.f32 %v271, 0.044146545
    %v292 = vmul.f32 %v272, 0.044146545
    %v293 = vmul.f32 %v273, 0.044146545
    %v294 = vmul.f32 %v274, 0.044146545
    %v295 = vmul.f32 %v275, 0.044146545
    %v296 = vmul.f32 %v276, 0.044146545
    %v297 = vmul.f32 %v277, 0.044146545
    %v298 = vmul.f32 %v278, 0.044146545
    %v299 = vmul.f32 %v259, 0.11722289
    %v300 = vmul.f32 %v260, 0.11722289
    %v301 = vmul.f32 %v261, 0.11722289
    %v302 = vmul.f32 %v262, 0.11722289
    %v303 = vmul.f32 %v263, 0.11722289
    %v304 = vmul.f32 %v264, 0.11722289
    %v305 = vmul.f32 %v265, 0.11722289
    %v306 = vmul.f32 %v266, 0.11722289
    %v307 = vmul.f32 %v267, 0.11722289
    %v308 = vmul.f32 %v268, 0.11722289
    %v309 = vmul.f32 %v269, 0.11722289
    %v310 = vmul.f32 %v270, 0.11722289
    %v311 = vmul.f32 %v271, 0.11722289
    %v312 = vmul.f32 %v272, 0.11722289
    %v313 = vmul.f32 %v273, 0.11722289
    %v314 = vmul.f32 %v274, 0.11722289
    %v315 = vmul.f32 %v275, 0.11722289
    %v316 = vmul.f32 %v276, 0.11722289
    %v317 = vmul.f32 %v277, 0.11722289
    %v318 = vmul.f32 %v278, 0.11722289
    %vm339 = vcmask 1046528
    %v340 = vrot.slane %v299, 1
    %v341 = vrot.slane %v300, 1
    %v342 = vsel %vm339, %v340, %v341
    %v343 = vrot.slane %v301, 1
    %v344 = vrot.slane %v302, 1
    %v345 = vsel %vm339, %v343, %v344
    %v346 = vrot.slane %v303, 1
    %v347 = vrot.slane %v304, 1
    %v348 = vsel %vm339, %v346, %v347
    %v349 = vrot.slane %v305, 1
    %v350 = vrot.slane %v306, 1
    %v351 = vsel %vm339, %v349, %v350
    %v352 = vrot.slane %v307, 1
    %v353 = vrot.slane %v308, 1
    %v354 = vsel %vm339, %v352, %v353
    %v355 = vrot.slane %v309, 1
    %v356 = vrot.slane %v310, 1
    %v357 = vsel %vm339, %v355, %v356
    %v358 = vrot.slane %v311, 1
    %v359 = vrot.slane %v312, 1
    %v360 = vsel %vm339, %v358, %v359
    %v361 = vrot.slane %v313, 1
    %v362 = vrot.slane %v314, 1
    %v363 = vsel %vm339, %v361, %v362
    %v364 = vrot.slane %v315, 1
    %v365 = vrot.slane %v316, 1
    %v366 = vsel %vm339, %v364, %v365
    %v367 = vrot.slane %v317, 1
    %v368 = vrot.slane %v318, 1
    %v369 = vsel %vm339, %v367, %v368
    %v390 = vadd.f32 %v279, %v342
    %v391 = vadd.f32 %v280, %v341
    %v392 = vadd.f32 %v281, %v345
    %v393 = vadd.f32 %v282, %v344
    %v394 = vadd.f32 %v283, %v348
    %v395 = vadd.f32 %v284, %v347
    %v396 = vadd.f32 %v285, %v351
    %v397 = vadd.f32 %v286, %v350
    %v398 = vadd.f32 %v287, %v354
    %v399 = vadd.f32 %v288, %v353
    %v400 = vadd.f32 %v289, %v357
    %v401 = vadd.f32 %v290, %v356
    %v402 = vadd.f32 %v291, %v360
    %v403 = vadd.f32 %v292, %v359
    %v404 = vadd.f32 %v293, %v363
    %v405 = vadd.f32 %v294, %v362
    %v406 = vadd.f32 %v295, %v366
    %v407 = vadd.f32 %v296, %v365
    %v408 = vadd.f32 %v297, %v369
    %v409 = vadd.f32 %v298, %v368
    %v410 = vmul.f32 %v259, 0.21061139
    %v411 = vmul.f32 %v260, 0.21061139
    %v412 = vmul.f32 %v261, 0.21061139
    %v413 = vmul.f32 %v262, 0.21061139
    %v414 = vmul.f32 %v263, 0.21061139
    %v415 = vmul.f32 %v264, 0.21061139
    %v416 = vmul.f32 %v265, 0.21061139
    %v417 = vmul.f32 %v266, 0.21061139
    %v418 = vmul.f32 %v267, 0.21061139
    %v419 = vmul.f32 %v268, 0.21061139
    %v420 = vmul.f32 %v269, 0.21061139
    %v421 = vmul.f32 %v270, 0.21061139
    %v422 = vmul.f32 %v271, 0.21061139
    %v423 = vmul.f32 %v272, 0.21061139
    %v424 = vmul.f32 %v273, 0.21061139
    %v425 = vmul.f32 %v274, 0.21061139
    %v426 = vmul.f32 %v275, 0.21061139
    %v427 = vmul.f32 %v276, 0.21061139
    %v428 = vmul.f32 %v277, 0.21061139
    %v429 = vmul.f32 %v278, 0.21061139
    %vm450 = vcmask 1045504
    %v451 = vrot.slane %v410, 2
    %v452 = vrot.slane %v411, 2
    %v453 = vsel %vm450, %v451, %v452
    %v454 = vrot.slane %v412, 2
    %v455 = vrot.slane %v413, 2
    %v456 = vsel %vm450, %v454, %v455
    %v457 = vrot.slane %v414, 2
    %v458 = vrot.slane %v415, 2
    %v459 = vsel %vm450, %v457, %v458
    %v460 = vrot.slane %v416, 2
    %v461 = vrot.slane %v417, 2
    %v462 = vsel %vm450, %v460, %v461
    %v463 = vrot.slane %v418, 2
    %v464 = vrot.slane %v419, 2
    %v465 = vsel %vm450, %v463, %v464
    %v466 = vrot.slane %v420, 2
    %v467 = vrot.slane %v421, 2
    %v468 = vsel %vm450, %v466, %v467
    %v469 = vrot.slane %v422, 2
    %v470 = vrot.slane %v423, 2
    %v471 = vsel %vm450, %v469, %v470
    %v472 = vrot.slane %v424, 2
    %v473 = vrot.slane %v425, 2
    %v474 = vsel %vm450, %v472, %v473
    %v475 = vrot.slane %v426, 2
    %v476 = vrot.slane %v427, 2
    %v477 = vsel %vm450, %v475, %v476
    %v478 = vrot.slane %v428, 2
    %v479 = vrot.slane %v429, 2
    %v480 = vsel %vm450, %v478, %v479
    %v501 = vadd.f32 %v390, %v453
    %v502 = vadd.f32 %v391, %v452
    %v503 = vadd.f32 %v392, %v456
    %v504 = vadd.f32 %v393, %v455
    %v505 = vadd.f32 %v394, %v459
    %v506 = vadd.f32 %v395, %v458
    %v507 = vadd.f32 %v396, %v462
    %v508 = vadd.f32 %v397, %v461
    %v509 = vadd.f32 %v398, %v465
    %v510 = vadd.f32 %v399, %v464
    %v511 = vadd.f32 %v400, %v468
    %v512 = vadd.f32 %v401, %v467
    %v513 = vadd.f32 %v402, %v471
    %v514 = vadd.f32 %v403, %v470
    %v515 = vadd.f32 %v404, %v474
    %v516 = vadd.f32 %v405, %v473
    %v517 = vadd.f32 %v406, %v477
    %v518 = vadd.f32 %v407, %v476
    %v519 = vadd.f32 %v408, %v480
    %v520 = vadd.f32 %v409, %v479
    %v521 = vmul.f32 %v259, 0.25603834
    %v522 = vmul.f32 %v260, 0.25603834
    %v523 = vmul.f32 %v261, 0.25603834
    %v524 = vmul.f32 %v262, 0.25603834
    %v525 = vmul.f32 %v263, 0.25603834
    %v526 = vmul.f32 %v264, 0.25603834
    %v527 = vmul.f32 %v265, 0.25603834
    %v528 = vmul.f32 %v266, 0.25603834
    %v529 = vmul.f32 %v267, 0.25603834
    %v530 = vmul.f32 %v268, 0.25603834
    %v531 = vmul.f32 %v269, 0.25603834
    %v532 = vmul.f32 %v270, 0.25603834
    %v533 = vmul.f32 %v271, 0.25603834
    %v534 = vmul.f32 %v272, 0.25603834
    %v535 = vmul.f32 %v273, 0.25603834
    %v536 = vmul.f32 %v274, 0.25603834
    %v537 = vmul.f32 %v275, 0.25603834
    %v538 = vmul.f32 %v276, 0.25603834
    %v539 = vmul.f32 %v277, 0.25603834
    %v540 = vmul.f32 %v278, 0.25603834
    %vm561 = vcmask 1044480
    %v562 = vrot.slane %v521, 3
    %v563 = vrot.slane %v522, 3
    %v564 = vsel %vm561, %v562, %v563
    %v565 = vrot.slane %v523, 3
    %v566 = vrot.slane %v524, 3
    %v567 = vsel %vm561, %v565, %v566
    %v568 = vrot.slane %v525, 3
    %v569 = vrot.slane %v526, 3
    %v570 = vsel %vm561, %v568, %v569
    %v571 = vrot.slane %v527, 3
    %v572 = vrot.slane %v528, 3
    %v573 = vsel %vm561, %v571, %v572
    %v574 = vrot.slane %v529, 3
    %v575 = vrot.slane %v530, 3
    %v576 = vsel %vm561, %v574, %v575
    %v577 = vrot.slane %v531, 3
    %v578 = vrot.slane %v532, 3
    %v579 = vsel %vm561, %v577, %v578
    %v580 = vrot.slane %v533, 3
    %v581 = vrot.slane %v534, 3
    %v582 = vsel %vm561, %v580, %v581
    %v583 = vrot.slane %v535, 3
    %v584 = vrot.slane %v536, 3
    %v585 = vsel %vm561, %v583, %v584
    %v586 = vrot.slane %v537, 3
    %v587 = vrot.slane %v538, 3
    %v588 = vsel %vm561, %v586, %v587
    %v589 = vrot.slane %v539, 3
    %v590 = vrot.slane %v540, 3
    %v591 = vsel %vm561, %v589, %v590
    %v612 = vadd.f32 %v501, %v564
    %v613 = vadd.f32 %v502, %v563
    %v614 = vadd.f32 %v503, %v567
    %v615 = vadd.f32 %v504, %v566
    %v616 = vadd.f32 %v505, %v570
    %v617 = vadd.f32 %v506, %v569
    %v618 = vadd.f32 %v507, %v573
    %v619 = vadd.f32 %v508, %v572
    %v620 = vadd.f32 %v509, %v576
    %v621 = vadd.f32 %v510, %v575
    %v622 = vadd.f32 %v511, %v579
    %v623 = vadd.f32 %v512, %v578
    %v624 = vadd.f32 %v513, %v582
    %v625 = vadd.f32 %v514, %v581
    %v626 = vadd.f32 %v515, %v585
    %v627 = vadd.f32 %v516, %v584
    %v628 = vadd.f32 %v517, %v588
    %v629 = vadd.f32 %v518, %v587
    %v630 = vadd.f32 %v519, %v591
    %v631 = vadd.f32 %v520, %v590
    %vm632 = vcmask 1043456
    %v633 = vrot.slane %v410, 4
    %v634 = vrot.slane %v411, 4
    %v635 = vsel %vm632, %v633, %v634
    %v636 = vrot.slane %v412, 4
    %v637 = vrot.slane %v413, 4
    %v638 = vsel %vm632, %v636, %v637
    %v639 = vrot.slane %v414, 4
    %v640 = vrot.slane %v415, 4
    %v641 = vsel %vm632, %v639, %v640
    %v642 = vrot.slane %v416, 4
    %v643 = vrot.slane %v417, 4
    %v644 = vsel %vm632, %v642, %v643
    %v645 = vrot.slane %v418, 4
    %v646 = vrot.slane %v419, 4
    %v647 = vsel %vm632, %v645, %v646
    %v648 = vrot.slane %v420, 4
    %v649 = vrot.slane %v421, 4
    %v650 = vsel %vm632, %v648, %v649
    %v651 = vrot.slane %v422, 4
    %v652 = vrot.slane %v423, 4
    %v653 = vsel %vm632, %v651, %v652
    %v654 = vrot.slane %v424, 4
    %v655 = vrot.slane %v425, 4
    %v656 = vsel %vm632, %v654, %v655
    %v657 = vrot.slane %v426, 4
    %v658 = vrot.slane %v427, 4
    %v659 = vsel %vm632, %v657, %v658
    %v660 = vrot.slane %v428, 4
    %v661 = vrot.slane %v429, 4
    %v662 = vsel %vm632, %v660, %v661
    %v683 = vadd.f32 %v612, %v635
    %v684 = vadd.f32 %v613, %v634
    %v685 = vadd.f32 %v614, %v638
    %v686 = vadd.f32 %v615, %v637
    %v687 = vadd.f32 %v616, %v641
    %v688 = vadd.f32 %v617, %v640
    %v689 = vadd.f32 %v618, %v644
    %v690 = vadd.f32 %v619, %v643
    %v691 = vadd.f32 %v620, %v647
    %v692 = vadd.f32 %v621, %v646
    %v693 = vadd.f32 %v622, %v650
    %v694 = vadd.f32 %v623, %v649
    %v695 = vadd.f32 %v624, %v653
    %v696 = vadd.f32 %v625, %v652
    %v697 = vadd.f32 %v626, %v656
    %v698 = vadd.f32 %v627, %v655
    %v699 = vadd.f32 %v628, %v659
    %v700 = vadd.f32 %v629, %v658
    %v701 = vadd.f32 %v630, %v662
    %v702 = vadd.f32 %v631, %v661
    %vm703 = vcmask 1042432
    %v704 = vrot.slane %v299, 5
    %v705 = vrot.slane %v300, 5
    %v706 = vsel %vm703, %v704, %v705
    %v707 = vrot.slane %v301, 5
    %v708 = vrot.slane %v302, 5
    %v709 = vsel %vm703, %v707, %v708
    %v710 = vrot.slane %v303, 5
    %v711 = vrot.slane %v304, 5
    %v712 = vsel %vm703, %v710, %v711
    %v713 = vrot.slane %v305, 5
    %v714 = vrot.slane %v306, 5
    %v715 = vsel %vm703, %v713, %v714
    %v716 = vrot.slane %v307, 5
    %v717 = vrot.slane %v308, 5
    %v718 = vsel %vm703, %v716, %v717
    %v719 = vrot.slane %v309, 5
    %v720 = vrot.slane %v310, 5
    %v721 = vsel %vm703, %v719, %v720
    %v722 = vrot.slane %v311, 5
    %v723 = vrot.slane %v312, 5
    %v724 = vsel %vm703, %v722, %v723
    %v725 = vrot.slane %v313, 5
    %v726 = vrot.slane %v314, 5
    %v727 = vsel %vm703, %v725, %v726
    %v728 = vrot.slane %v315, 5
    %v729 = vrot.slane %v316, 5
    %v730 = vsel %vm703, %v728, %v729
    %v731 = vrot.slane %v317, 5
    %v732 = vrot.slane %v318, 5
    %v733 = vsel %vm703, %v731, %v732
    %v754 = vadd.f32 %v683, %v706
    %v755 = vadd.f32 %v684, %v705
    %v756 = vadd.f32 %v685, %v709
    %v757 = vadd.f32 %v686, %v708
    %v758 = vadd.f32 %v687, %v712
    %v759 = vadd.f32 %v688, %v711
    %v760 = vadd.f32 %v689, %v715
    %v761 = vadd.f32 %v690, %v714
    %v762 = vadd.f32 %v691, %v718
    %v763 = vadd.f32 %v692, %v717
    %v764 = vadd.f32 %v693, %v721
    %v765 = vadd.f32 %v694, %v720
    %v766 = vadd.f32 %v695, %v724
    %v767 = vadd.f32 %v696, %v723
    %v768 = vadd.f32 %v697, %v727
    %v769 = vadd.f32 %v698, %v726
    %v770 = vadd.f32 %v699, %v730
    %v771 = vadd.f32 %v700, %v729
    %v772 = vadd.f32 %v701, %v733
    %v773 = vadd.f32 %v702, %v732
    %vm794 = vcmask 1041408
    %v795 = vrot.slane %v279, 6
    %v796 = vrot.slane %v280, 6
    %v797 = vsel %vm794, %v795, %v796
    %v798 = vrot.slane %v281, 6
    %v799 = vrot.slane %v282, 6
    %v800 = vsel %vm794, %v798, %v799
    %v801 = vrot.slane %v283, 6
    %v802 = vrot.slane %v284, 6
    %v803 = vsel %vm794, %v801, %v802
    %v804 = vrot.slane %v285, 6
    %v805 = vrot.slane %v286, 6
    %v806 = vsel %vm794, %v804, %v805
    %v807 = vrot.slane %v287, 6
    %v808 = vrot.slane %v288, 6
    %v809 = vsel %vm794, %v807, %v808
    %v810 = vrot.slane %v289, 6
    %v811 = vrot.slane %v290, 6
    %v812 = vsel %vm794, %v810, %v811
    %v813 = vrot.slane %v291, 6
    %v814 = vrot.slane %v292, 6
    %v815 = vsel %vm794, %v813, %v814
    %v816 = vrot.slane %v293, 6
    %v817 = vrot.slane %v294, 6
    %v818 = vsel %vm794, %v816, %v817
    %v819 = vrot.slane %v295, 6
    %v820 = vrot.slane %v296, 6
    %v821 = vsel %vm794, %v819, %v820
    %v822 = vrot.slane %v297, 6
    %v823 = vrot.slane %v298, 6
    %v824 = vsel %vm794, %v822, %v823
    %v845 = vadd.f32 %v754, %v797
    %v846 = vadd.f32 %v755, %v796
    %v847 = vadd.f32 %v756, %v800
    %v848 = vadd.f32 %v757, %v799
    %v849 = vadd.f32 %v758, %v803
    %v850 = vadd.f32 %v759, %v802
    %v851 = vadd.f32 %v760, %v806
    %v852 = vadd.f32 %v761, %v805
    %v853 = vadd.f32 %v762, %v809
    %v854 = vadd.f32 %v763, %v808
    %v855 = vadd.f32 %v764, %v812
    %v856 = vadd.f32 %v765, %v811
    %v857 = vadd.f32 %v766, %v815
    %v858 = vadd.f32 %v767, %v814
    %v859 = vadd.f32 %v768, %v818
    %v860 = vadd.f32 %v769, %v817
    %v861 = vadd.f32 %v770, %v821
    %v862 = vadd.f32 %v771, %v820
    %v863 = vadd.f32 %v772, %v824
    %v864 = vadd.f32 %v773, %v823
    %865 = vst [vmem:[#allocation5] sm:$0xff] %v845
    %866 = vst [vmem:[#allocation5 + $0x8] sm:$0x3] %v846
    %867 = vst [vmem:[#allocation5 + $0x10] sm:$0xff] %v847
    %868 = vst [vmem:[#allocation5 + $0x18] sm:$0x3] %v848
    %869 = vst [vmem:[#allocation5 + $0x20] sm:$0xff] %v849
    %870 = vst [vmem:[#allocation5 + $0x28] sm:$0x3] %v850
    %871 = vst [vmem:[#allocation5 + $0x30] sm:$0xff] %v851
    %872 = vst [vmem:[#allocation5 + $0x38] sm:$0x3] %v852
    %873 = vst [vmem:[#allocation5 + $0x40] sm:$0xff] %v853
    %874 = vst [vmem:[#allocation5 + $0x48] sm:$0x3] %v854
    %875 = vst [vmem:[#allocation5 + $0x50] sm:$0xff] %v855
    %876 = vst [vmem:[#allocation5 + $0x58] sm:$0x3] %v856
    %877 = vst [vmem:[#allocation5 + $0x60] sm:$0xff] %v857
    %878 = vst [vmem:[#allocation5 + $0x68] sm:$0x3] %v858
    %879 = vst [vmem:[#allocation5 + $0x70] sm:$0xff] %v859
    %880 = vst [vmem:[#allocation5 + $0x78] sm:$0x3] %v860
    %881 = vst [vmem:[#allocation5 + $0x80] sm:$0xff] %v861
    %882 = vst [vmem:[#allocation5 + $0x88] sm:$0x3] %v862
    %883 = vst [vmem:[#allocation5 + $0x90] sm:$0xff] %v863
    %884 = vst [vmem:[#allocation5 + $0x98] sm:$0x3] %v864
    // Predicated region
    $region10: #{tpu_custom_call.1} parent=1 // pred_check
      _
    $region11: #{tpu_custom_call.1} parent=1 // pred_check_branch
      %886 = sbr.rel (0) target = $region13
    $region12: #{tpu_custom_call.1} parent=1 // pred_region
      %s888 = ssub.s32 2560, 2560
      %889 = vsyncadd [#allocation4], %s888
      %s890 = sshll.u32 [#allocation5], 4
      %s891 = int_to_ptr.vmem [resolvable:$true] %s890
      %896 = dma.vmem_to_hbm [thread:$0]  %s891, 2560, %s1, [#allocation4], 128, 128, 8
    $region13: #{tpu_custom_call.1} parent=1 // pred_fallthru
      _
    // Predicated region
    $region14: #{tpu_custom_call.1} parent=1 // pred_check
      _
    $region15: #{tpu_custom_call.1} parent=1 // pred_check_branch
      %898 = sbr.rel (0) target = $region17
    $region16: #{tpu_custom_call.1} parent=1 // pred_region
      %899 = dma.done [#allocation4], 2560
    $region17: #{tpu_custom_call.1} parent=1 // pred_fallthru
      _
    %900 = vsyncpa [#allocation3], 1
    %901 = vsyncpa [#allocation4], 1

</llo_original>
